<compile_context>
chip_gen: v7x
topology: tpu7x:2x2x1
jax: 0.10.0
libtpu: 0.0.40
codegen_flags: <defaults>
</compile_context>

<pallas_src>
import jax
import jax.numpy as jnp
from jax.experimental import pallas as pl
from jax.experimental.pallas import tpu as pltpu

_LANE = 128
_VMEM_TILE_BUDGET = 16 << 20   # bytes for the 2x(in) + 2x(out) streamed buffers
_VMEM_LIMIT_BYTES = 32 << 20   # scoped VMEM limit: safe on v5e / v6e / v7x


def _round_up(x, m):
    return ((x + m - 1) // m) * m


def _target_lanes():
    """256-lane folds on the 256-wide-MXU chips (v6e/v7x), 128 elsewhere."""
    try:
        kind = jax.devices()[0].device_kind.lower()
    except Exception:
        return _LANE
    if ("v6" in kind) or ("v7" in kind) or ("7x" in kind):
        return 2 * _LANE
    return _LANE


def _pick_fold(K, N, target_lanes):
    """Smallest-overhead fold that makes both K*f and N*f lane-dense."""
    if K % _LANE == 0 and N % _LANE == 0:
        return 1
    best = 1
    for f in (2, 4, 8):
        if (K * f) % _LANE == 0 and (N * f) % _LANE == 0 \
                and K * f <= target_lanes and N * f <= target_lanes:
            best = f
    return best


def select_gate_kernel(x_ref, w_ref, b_ref, o_ref):
    # x_ref: (TM, Kf) streamed folded row tile
    # w_ref: (Kf, Nf) resident block-diagonal weight (f32)
    # b_ref: (1, Nf)  resident fold-tiled bias (f32)
    # o_ref: (TM, Nf) output tile
    # Note: the partial last tile reads past-M rows from the padded window;
    # tanh is bounded so nothing blows up, and Pallas masks them on writeback.
    acc = jnp.dot(x_ref[...], w_ref[...], preferred_element_type=jnp.float32)
    acc = acc + b_ref[...]
    o_ref[...] = jnp.tanh(acc).astype(o_ref.dtype)


def select_gate(context, weight, bias, *, fold=None, tm=None):
    """tanh(context @ weight + bias).

    context: [B, S, K]; weight: [K, N] == torch weight.T ([in, out]); bias: [N].
    Output dtype follows `context` (stream bf16 activations for inference);
    weight/bias are kept resident in f32 so parameters are never quantized.
    """
    B, S, K = context.shape
    Kw, N = weight.shape
    assert Kw == K, "weight must be [in_features, out_features] (torch weight.T)"

    M = B * S
    x = context.reshape(M, K)
    x_isz = jnp.dtype(context.dtype).itemsize

    # --- fold rows into lanes so loads/stores are 128-lane (256 on v6e/v7x) dense
    if fold is None:
        fold = _pick_fold(K, N, _target_lanes())
    M_pad = _round_up(M, fold)
    if M_pad != M:
        # Zero-pad so folded super-rows are well formed; sliced off after the call.
        x = jnp.pad(x, ((0, M_pad - M), (0, 0)))
    Mf, Kf, Nf = M_pad // fold, fold * K, fold * N
    x_f = x.reshape(Mf, Kf)

    # Resident params in f32 (tiny): exact-zero off-diagonal blocks so folded
    # rows cannot leak into each other; bias replicated once per fold block.
    w32 = weight.astype(jnp.float32)
    b32 = bias.astype(jnp.float32)
    eye = jnp.eye(fold, dtype=jnp.float32)
    w_bd = jnp.einsum("ij,kn->ikjn", eye, w32).reshape(Kf, Nf)
    b_t = jnp.tile(b32, fold).reshape(1, Nf)

    # --- row-tile: largest tile whose 2x(in) + 2x(out) buffers fit the budget
    sub = 8 * max(1, 4 // x_isz)                       # sublane pack: f32->8, bf16->16
    bytes_per_row = (Kf + Nf) * x_isz
    budget_rows = max(sub, _VMEM_TILE_BUDGET // (2 * bytes_per_row))
    if tm is None:
        tm = budget_rows
    tm = min(tm, Mf)
    if tm < Mf:
        tm = max(sub, (tm // sub) * sub)               # keep (8,128)-friendly blocks
    grid_m = pl.cdiv(Mf, tm)
    if grid_m > 1 and grid_m % 2 == 1:
        # Even grid so v7x's two TensorCores split the "parallel" axis evenly.
        tm = max(sub, _round_up(pl.cdiv(Mf, grid_m + 1), sub))
        grid_m = pl.cdiv(Mf, tm)

    cost = pl.CostEstimate(
        flops=2 * Mf * Kf * Nf,
        transcendentals=M_pad * N,  # tanh
        bytes_accessed=(Mf * Kf + Mf * Nf) * x_isz + (Kf * Nf + Nf) * 4,
    )

    out = pl.pallas_call(
        select_gate_kernel,
        out_shape=jax.ShapeDtypeStruct((Mf, Nf), context.dtype),
        grid_spec=pltpu.PrefetchScalarGridSpec(
            num_scalar_prefetch=0,
            grid=(grid_m,),
            in_specs=[
                pl.BlockSpec((tm, Kf), lambda i: (i, 0)),   # streamed folded rows
                pl.BlockSpec((Kf, Nf), lambda i: (0, 0)),   # resident block-diag W
                pl.BlockSpec((1, Nf), lambda i: (0, 0)),    # resident tiled bias
            ],
            out_specs=pl.BlockSpec((tm, Nf), lambda i: (i, 0)),
        ),
        compiler_params=pltpu.CompilerParams(
            dimension_semantics=("parallel",),
            vmem_limit_bytes=_VMEM_LIMIT_BYTES,
        ),
        cost_estimate=cost,
    )(x_f, w_bd, b_t)

    # Unfold back to rows and drop the fold padding.
    out = out.reshape(M_pad, N)
    if M_pad != M:
        out = out[:M]
    return out.reshape(B, S, N)


def reference_select_gate(context, weight, bias):
    return jnp.tanh(jnp.einsum("bsk,kn->bsn", context, weight) + bias)


if __name__ == "__main__":
    # config.encoder_hidden_size = 32  ->  linear1: Linear(64, 64)
    encoder_hidden_size = 32
    H2 = encoder_hidden_size * 2
    batch, seq = 2, 8

    key = jax.random.PRNGKey(0)
    k_ctx, k_w, k_b = jax.random.split(key, 3)

    context = jax.random.normal(k_ctx, (batch, seq, H2), dtype=jnp.float32)
    # Deterministic "Linear" parameters (synthetic, not a checkpoint load).
    # Stored as [in_features, out_features] == torch weight.T
    weight = jax.random.normal(k_w, (H2, H2), dtype=jnp.float32) * 0.1
    bias = jax.random.normal(k_b, (H2,), dtype=jnp.float32) * 0.1

    # --- f32 path, chip-selected fold (matches the PyTorch module semantics) ---
    out = jax.block_until_ready(select_gate(context, weight, bias))
    ref = reference_select_gate(context, weight, bias)
    assert out.shape == (batch, seq, H2)
    assert jnp.allclose(out, ref, atol=1e-5, rtol=1e-5)

    # --- explicit fold=2 path (the 128-lane config used on v5e) ---
    out_f2 = jax.block_until_ready(select_gate(context, weight, bias, fold=2))
    assert jnp.allclose(out_f2, ref, atol=1e-5, rtol=1e-5)

    # --- ragged rows: B*S not a multiple of the fold (exercises pad + mask) ---
    ctx_odd = context[:, : seq - 1, :]                 # M = 14
    out_odd = jax.block_until_ready(select_gate(ctx_odd, weight, bias))
    ref_odd = reference_select_gate(ctx_odd, weight, bias)
    assert jnp.allclose(out_odd, ref_odd, atol=1e-5, rtol=1e-5)

    # --- bf16 activation streaming (weight/bias stay f32 and resident) ---
    ctx_bf16 = context.astype(jnp.bfloat16)
    out_bf16 = jax.block_until_ready(select_gate(ctx_bf16, weight, bias))
    ref_bf16 = reference_select_gate(ctx_bf16.astype(jnp.float32), weight, bias)
    assert out_bf16.dtype == jnp.bfloat16
    assert jnp.allclose(out_bf16.astype(jnp.float32), ref_bf16, atol=2e-2, rtol=2e-2)

    print("KERNEL_OK")
</pallas_src>

<mosaic_0001>
module attributes {stable_mosaic.version = 11 : i64} {
  func.func @select_gate_kernel(%arg0: i32, %arg1: memref<8x128xf32, #tpu.memory_space<vmem>>, %arg2: memref<128x128xf32, #tpu.memory_space<vmem>>, %arg3: memref<1x128xf32, #tpu.memory_space<vmem>>, %arg4: memref<8x128xf32, #tpu.memory_space<vmem>>) attributes {dimension_semantics = [#tpu.dimension_semantics<parallel>], iteration_bounds = array<i64: 1>, scalar_prefetch = 0 : i64, scratch_operands = 0 : i64, tpu.core_type = #tpu.core_type<tc>, window_params = [{transform_indices = @transform_0, window_bounds = array<i64: 8, 128>}, {pipeline_mode = #tpu.pipeline_mode<synchronous>, transform_indices = @transform_1, window_bounds = array<i64: 128, 128>}, {pipeline_mode = #tpu.pipeline_mode<synchronous>, transform_indices = @transform_2, window_bounds = array<i64: 1, 128>}, {transform_indices = @transform_3, window_bounds = array<i64: 8, 128>}]} {
    %c0 = arith.constant 0 : index
    %c0_0 = arith.constant 0 : index
    %0 = vector.load %arg1[%c0, %c0_0] : memref<8x128xf32, #tpu.memory_space<vmem>>, vector<8x128xf32>
    %c0_1 = arith.constant 0 : index
    %c0_2 = arith.constant 0 : index
    %1 = vector.load %arg2[%c0_1, %c0_2] : memref<128x128xf32, #tpu.memory_space<vmem>>, vector<128x128xf32>
    %cst = arith.constant dense<0.000000e+00> : vector<8x128xf32>
    %2 = tpu.matmul %0, %1, %cst {dimension_numbers = #tpu.dot_dimension_numbers<[1], [0], [0], [1], [0, 0, 1, 1], [], []>} : vector<8x128xf32>, vector<128x128xf32>, vector<8x128xf32> -> vector<8x128xf32>
    %c0_3 = arith.constant 0 : index
    %c0_4 = arith.constant 0 : index
    %3 = vector.load %arg3[%c0_3, %c0_4] : memref<1x128xf32, #tpu.memory_space<vmem>>, vector<1x128xf32>
    %4 = vector.broadcast %3 : vector<1x128xf32> to vector<8x128xf32>
    %5 = arith.addf %2, %4 : vector<8x128xf32>
    %6 = math.tanh %5 : vector<8x128xf32>
    %c0_5 = arith.constant 0 : index
    %c0_6 = arith.constant 0 : index
    %7 = vector.load %arg4[%c0_5, %c0_6] : memref<8x128xf32, #tpu.memory_space<vmem>>, vector<8x128xf32>
    tpu.vector_store %arg4[%c0_5, %c0_6], %6 {strides = array<i32>} : memref<8x128xf32, #tpu.memory_space<vmem>>, vector<8x128xf32>,
    return
  }
  func.func @transform_0(%arg0: i32) -> (i32, i32) {
    %c0_i32 = arith.constant 0 : i32
    %c0_i32_0 = arith.constant 0 : i32
    return %arg0, %c0_i32 : i32, i32
  }
  func.func @transform_1(%arg0: i32) -> (i32, i32) {
    %c0_i32 = arith.constant 0 : i32
    %c0_i32_0 = arith.constant 0 : i32
    %c0_i32_1 = arith.constant 0 : i32
    return %c0_i32, %c0_i32_0 : i32, i32
  }
  func.func @transform_2(%arg0: i32) -> (i32, i32) {
    %c0_i32 = arith.constant 0 : i32
    %c0_i32_0 = arith.constant 0 : i32
    %c0_i32_1 = arith.constant 0 : i32
    return %c0_i32, %c0_i32_0 : i32, i32
  }
  func.func @transform_3(%arg0: i32) -> (i32, i32) {
    %c0_i32 = arith.constant 0 : i32
    %c0_i32_0 = arith.constant 0 : i32
    return %arg0, %c0_i32 : i32, i32
  }
}

</mosaic_0001>

<llo_original>
// kernel: tpu_custom_call.1
$region0: #{tpu_custom_call.1}
  #allocation0 [shape = 'u32[]', space=smem, size = 0x4, offset = 0x4, fixed_abs, tag = 'smem constant byte address 0x4 - core index']
  #allocation1 [shape = 'u32[144,128]{1,0:T(1,128)}', space=vmem, size = 0x12000, scoped, tag = 'internal scratch']
  %s0 = inlined_call_operand.hbm [shape: f32[8,128], index: 0, kind: input, shape index: {}]
  %s1 = inlined_call_operand.hbm [shape: f32[128,128], index: 1, kind: input, shape index: {}]
  %s2 = inlined_call_operand.vmem [shape: f32[1,128], index: 2, kind: input, shape index: {}]
  %s3 = inlined_call_operand.hbm [shape: f32[8,128], index: 3, kind: output, shape index: {}]
  %s4 = sld [smem:[#allocation0]]
  $region30: #{tpu_custom_call.1} parent=0
    _
  %s6 = ssub.s32 1, %s4
  %s7 = scalar_select 0, %s6, %s4
  $region1: #{tpu_custom_call.1} parent=0
    #allocation2 [shape = 'u8[4096]{0}', space=vmem, size = 0x1000, scoped, tag = 'input window, operand 0, single buffered']
    #allocation3 [shape = 's32[1]{0}', space=sflag, size = 0x4, scoped, tag = 'scoped memory for tpu_custom_call.1']
    #allocation4 [shape = 's32[1]{0}', space=sflag, size = 0x4, scoped, tag = 'scoped memory for tpu_custom_call.1']
    #allocation5 [shape = 'u8[65536]{0}', space=vmem, size = 0x10000, scoped, tag = 'input window, operand 1, single buffered']
    #allocation6 [shape = 's32[1]{0}', space=sflag, size = 0x4, scoped, tag = 'scoped memory for tpu_custom_call.1']
    #allocation7 [shape = 'u8[4096]{0}', space=vmem, size = 0x1000, scoped, tag = 'output window, operand 0, single buffered']
    %8 = vsyncpa [#allocation3], 0
    %9 = vsyncpa [#allocation6], 0
    %10 = vsyncpa [#allocation4], 0
    // Predicated region
    $region2: #{tpu_custom_call.1} parent=1 // pred_check
      _
    $region3: #{tpu_custom_call.1} parent=1 // pred_check_branch
      %12 = sbr.rel (0) target = $region5
    $region4: #{tpu_custom_call.1} parent=1 // pred_region
      %s14 = ssub.s32 128, 128
      %15 = vsyncadd [#allocation3], %s14
      %s17 = sshll.u32 [#allocation2], 4
      %s18 = int_to_ptr.vmem [resolvable:$true] %s17
      %20 = dma.hbm_to_vmem [thread:$0]  %s0, 128, %s18, [#allocation3]
    $region5: #{tpu_custom_call.1} parent=1 // pred_fallthru
      _
    // Predicated region
    $region6: #{tpu_custom_call.1} parent=1 // pred_check
      _
    $region7: #{tpu_custom_call.1} parent=1 // pred_check_branch
      %22 = sbr.rel (0) target = $region9
    $region8: #{tpu_custom_call.1} parent=1 // pred_region
      %s24 = ssub.s32 2048, 2048
      %25 = vsyncadd [#allocation6], %s24
      %s26 = sshll.u32 [#allocation5], 4
      %s27 = int_to_ptr.vmem [resolvable:$true] %s26
      %32 = dma.hbm_to_vmem [thread:$0]  %s1, 2048, %s27, [#allocation6], 128, 128, 8
    $region9: #{tpu_custom_call.1} parent=1 // pred_fallthru
      _
    // Predicated region
    $region10: #{tpu_custom_call.1} parent=1 // pred_check
      _
    $region11: #{tpu_custom_call.1} parent=1 // pred_check_branch
      %34 = sbr.rel (0) target = $region13
    $region12: #{tpu_custom_call.1} parent=1 // pred_region
      _
    $region13: #{tpu_custom_call.1} parent=1 // pred_fallthru
      _
    // Predicated region
    $region14: #{tpu_custom_call.1} parent=1 // pred_check
      _
    $region15: #{tpu_custom_call.1} parent=1 // pred_check_branch
      %36 = sbr.rel (0) target = $region17
    $region16: #{tpu_custom_call.1} parent=1 // pred_region
      %37 = dma.done [#allocation3], 128
    $region17: #{tpu_custom_call.1} parent=1 // pred_fallthru
      _
    // Predicated region
    $region18: #{tpu_custom_call.1} parent=1 // pred_check
      _
    $region19: #{tpu_custom_call.1} parent=1 // pred_check_branch
      %39 = sbr.rel (0) target = $region21
    $region20: #{tpu_custom_call.1} parent=1 // pred_region
      %40 = dma.done [#allocation6], 2048
    $region21: #{tpu_custom_call.1} parent=1 // pred_fallthru
      _
    %v41 = vld [vmem:[#allocation2] sm:$0xff]
    %v42 = vld [vmem:[#allocation5] sm:$0xff]
    %v43 = vld [vmem:[#allocation5 + $0x8] sm:$0xff]
    %v44 = vld [vmem:[#allocation5 + $0x10] sm:$0xff]
    %v45 = vld [vmem:[#allocation5 + $0x18] sm:$0xff]
    %v46 = vld [vmem:[#allocation5 + $0x20] sm:$0xff]
    %v47 = vld [vmem:[#allocation5 + $0x28] sm:$0xff]
    %v48 = vld [vmem:[#allocation5 + $0x30] sm:$0xff]
    %v49 = vld [vmem:[#allocation5 + $0x38] sm:$0xff]
    %v50 = vld [vmem:[#allocation5 + $0x40] sm:$0xff]
    %v51 = vld [vmem:[#allocation5 + $0x48] sm:$0xff]
    %v52 = vld [vmem:[#allocation5 + $0x50] sm:$0xff]
    %v53 = vld [vmem:[#allocation5 + $0x58] sm:$0xff]
    %v54 = vld [vmem:[#allocation5 + $0x60] sm:$0xff]
    %v55 = vld [vmem:[#allocation5 + $0x68] sm:$0xff]
    %v56 = vld [vmem:[#allocation5 + $0x70] sm:$0xff]
    %v57 = vld [vmem:[#allocation5 + $0x78] sm:$0xff]
    %v58 = vld [vmem:[%s2] sm:$0x1]
    %v60 = vlaneseq
    %v61 = vshrl.u32 %v60, 7
    %v62 = vsub.s32 0, %v61
    %v63 = vrot.slane %v58, %v62
    %65 = vmatprep.subr.mxu0 0.0
    %66 = vmatpush1.msra.mxu0 %v42
    %67 = vmatprep.subr.mxu0 0.0
    %68 = vmatpush1.msra.mxu0 %v43
    %69 = vmatprep.subr.mxu0 0.0
    %70 = vmatpush1.msra.mxu0 %v44
    %71 = vmatprep.subr.mxu0 0.0
    %72 = vmatpush1.msra.mxu0 %v45
    %73 = vmatprep.subr.mxu0 0.0
    %74 = vmatpush1.msra.mxu0 %v46
    %75 = vmatprep.subr.mxu0 0.0
    %76 = vmatpush1.msra.mxu0 %v47
    %77 = vmatprep.subr.mxu0 0.0
    %78 = vmatpush1.msra.mxu0 %v48
    %79 = vmatprep.subr.mxu0 0.0
    %80 = vmatpush1.msra.mxu0 %v49
    %81 = vmatprep.subr.mxu0 0.0
    %82 = vmatpush1.msra.mxu0 %v50
    %83 = vmatprep.subr.mxu0 0.0
    %84 = vmatpush1.msra.mxu0 %v51
    %85 = vmatprep.subr.mxu0 0.0
    %86 = vmatpush1.msra.mxu0 %v52
    %87 = vmatprep.subr.mxu0 0.0
    %88 = vmatpush1.msra.mxu0 %v53
    %89 = vmatprep.subr.mxu0 0.0
    %90 = vmatpush1.msra.mxu0 %v54
    %91 = vmatprep.subr.mxu0 0.0
    %92 = vmatpush1.msra.mxu0 %v55
    %93 = vmatprep.subr.mxu0 0.0
    %94 = vmatpush1.msra.mxu0 %v56
    %95 = vmatprep.subr.mxu0 0.0
    %96 = vmatpush1.msra.mxu0 %v57
    %97 = vmatprep.subr.mxu0 0.0
    %98 = vmatpush1.msra.mxu0 0.0
    %99 = vmatprep.subr.mxu0 0.0
    %100 = vmatpush1.msra.mxu0 0.0
    %101 = vmatprep.subr.mxu0 0.0
    %102 = vmatpush1.msra.mxu0 0.0
    %103 = vmatprep.subr.mxu0 0.0
    %104 = vmatpush1.msra.mxu0 0.0
    %105 = vmatprep.subr.mxu0 0.0
    %106 = vmatpush1.msra.mxu0 0.0
    %107 = vmatprep.subr.mxu0 0.0
    %108 = vmatpush1.msra.mxu0 0.0
    %109 = vmatprep.subr.mxu0 0.0
    %110 = vmatpush1.msra.mxu0 0.0
    %111 = vmatprep.subr.mxu0 0.0
    %112 = vmatpush1.msra.mxu0 0.0
    %113 = vmatprep.subr.mxu0 0.0
    %114 = vmatpush1.msra.mxu0 0.0
    %115 = vmatprep.subr.mxu0 0.0
    %116 = vmatpush1.msra.mxu0 0.0
    %117 = vmatprep.subr.mxu0 0.0
    %118 = vmatpush1.msra.mxu0 0.0
    %119 = vmatprep.subr.mxu0 0.0
    %120 = vmatpush1.msra.mxu0 0.0
    %121 = vmatprep.subr.mxu0 0.0
    %122 = vmatpush1.msra.mxu0 0.0
    %123 = vmatprep.subr.mxu0 0.0
    %124 = vmatpush1.msra.mxu0 0.0
    %125 = vmatprep.subr.mxu0 0.0
    %126 = vmatpush1.msra.mxu0 0.0
    %127 = vmatprep.subr.mxu0 0.0
    %128 = vmatpush1.msra.mxu0 0.0
    %129 = vmatprep.mubr.f32.mxu0 0.0
    %130 = vmatmul.mubr.f32.gmra.mrb[0].mxu0 %v41
    %v131 = vpop.f32.mrb[0].mxu0
    %v132 = vadd.f32 %v63, %v131
    %v133 = vpop.f32.mrb[0].mxu0
    %134 = vdwg.mxu0
    %v135 = vtanh.pop %v132
    %136 = vst [vmem:[#allocation7] sm:$0xff] %v135
    // Predicated region
    $region22: #{tpu_custom_call.1} parent=1 // pred_check
      _
    $region23: #{tpu_custom_call.1} parent=1 // pred_check_branch
      %138 = sbr.rel (0) target = $region25
    $region24: #{tpu_custom_call.1} parent=1 // pred_region
      %s140 = ssub.s32 128, 128
      %141 = vsyncadd [#allocation4], %s140
      %s143 = sshll.u32 [#allocation7], 4
      %s144 = int_to_ptr.vmem [resolvable:$true] %s143
      %146 = dma.vmem_to_hbm [thread:$0]  %s144, 128, %s3, [#allocation4]
    $region25: #{tpu_custom_call.1} parent=1 // pred_fallthru
      _
    // Predicated region
    $region26: #{tpu_custom_call.1} parent=1 // pred_check
      _
    $region27: #{tpu_custom_call.1} parent=1 // pred_check_branch
      %148 = sbr.rel (0) target = $region29
    $region28: #{tpu_custom_call.1} parent=1 // pred_region
      %149 = dma.done [#allocation4], 128
    $region29: #{tpu_custom_call.1} parent=1 // pred_fallthru
      _
    %150 = vsyncpa [#allocation3], 1
    %151 = vsyncpa [#allocation6], 1
    %152 = vsyncpa [#allocation4], 1

</llo_original>
